<compile_context>
chip_gen: v6e
topology: v6e:2x2x1
jax: 0.10.0
libtpu: 0.0.40
codegen_flags: <defaults>
</compile_context>

<pallas_src>
import jax
import jax.numpy as jnp
from jax.experimental import pallas as pl
from jax.experimental.pallas import tpu as pltpu


# ----------------------------- Pallas kernels ------------------------------


def _gdv_kernel_resproj(x_ref, w1_ref, b1_ref, w2_ref, b2_ref, wr_ref, o_ref):
    """gdv_dim != topo_dim:  out = ReLU(x@w1+b1) @ w2 + x @ wr + (b2+br).

    b2_ref already holds (b2 + br) (folded host-side; tiny).  x is loaded as
    f32 and cast to the MXU dtype in-vreg; accumulation is f32; the bias/ReLU
    epilogue stays f32 (v5e has no bf16 VPU path).
    """
    x_f32 = x_ref[...]                                   # [tile, gdv_dim] f32
    x = x_f32.astype(w1_ref.dtype)                       # in-kernel cast only
    h = jnp.dot(x, w1_ref[...], preferred_element_type=jnp.float32) + b1_ref[...]
    h = jnp.maximum(h, 0.0).astype(w2_ref.dtype)         # ReLU, back to MXU dtype
    out = jnp.dot(h, w2_ref[...], preferred_element_type=jnp.float32)
    out = out + jnp.dot(x, wr_ref[...], preferred_element_type=jnp.float32)
    o_ref[...] = (out + b2_ref[...]).astype(o_ref.dtype)


def _gdv_kernel_identity(x_ref, w1_ref, b1_ref, w2_ref, b2_ref, o_ref):
    """gdv_dim == topo_dim: MLP + identity residual (residual added in f32)."""
    x_f32 = x_ref[...]                                   # [tile, topo] f32
    x = x_f32.astype(w1_ref.dtype)
    h = jnp.dot(x, w1_ref[...], preferred_element_type=jnp.float32) + b1_ref[...]
    h = jnp.maximum(h, 0.0).astype(w2_ref.dtype)
    out = jnp.dot(h, w2_ref[...], preferred_element_type=jnp.float32) + b2_ref[...]
    o_ref[...] = (out + x_f32).astype(o_ref.dtype)       # f32 residual (matches torch)


# ------------------------------- Wrapper ------------------------------------


def _round_up(x, m):
    return (x + m - 1) // m * m


def gdv_encoder(gdv, params, *, tile_rows=2048, compute_dtype=jnp.bfloat16,
                out_dtype=None):
    """GDVEncoder forward pass as a single fused Pallas kernel.

    gdv:    [N, gdv_dim] float32
    params: dict with w1 [gdv_dim, topo_dim], b1 [1, topo_dim],
                      w2 [topo_dim, topo_dim], b2 [1, topo_dim],
                      optionally wr [gdv_dim, topo_dim], br [1, topo_dim].
    compute_dtype: dtype fed to the MXU (bf16 default; f32 for exactness).
    out_dtype: output dtype; default gdv.dtype (f32, matches PyTorch).  Use
               bf16 to cut the HBM writeback ~2x in this mem-bound regime.
    """
    n, gdv_dim = gdv.shape
    topo_dim = params["w1"].shape[1]
    has_res_proj = gdv_dim != topo_dim
    out_dtype = gdv.dtype if out_dtype is None else out_dtype
    f32 = jnp.float32

    # ---- lane-align the output feature dim (only weights are padded) ----
    topo_pad = _round_up(topo_dim, 128)
    pad_out = topo_pad - topo_dim

    # Weight/bias prep is tiny (few KiB): casts + optional zero-pad of output
    # columns.  Under jit these fold into the surrounding graph.
    w1 = params["w1"].astype(compute_dtype)
    b1 = params["b1"].astype(f32)
    w2 = params["w2"].astype(compute_dtype)
    b2 = params["b2"].astype(f32)
    if pad_out:
        w1 = jnp.pad(w1, ((0, 0), (0, pad_out)))
        b1 = jnp.pad(b1, ((0, 0), (0, pad_out)))
        w2 = jnp.pad(w2, ((0, pad_out), (0, pad_out)))
        b2 = jnp.pad(b2, ((0, 0), (0, pad_out)))

    x = gdv  # NOT cast / padded on the host in the common paths.
    if has_res_proj:
        wr = params["wr"].astype(compute_dtype)
        br = params["br"].astype(f32)
        if pad_out:
            wr = jnp.pad(wr, ((0, 0), (0, pad_out)))
            br = jnp.pad(br, ((0, 0), (0, pad_out)))
        b2 = b2 + br  # fold the two output biases (tiny, host-side)
    elif pad_out:
        # Identity residual with a non-lane-aligned topo_dim: pad x's feature
        # dim once so the in-kernel residual add matches the padded output.
        # Never taken when topo_dim % 128 == 0 (the common case).
        x = jnp.pad(gdv, ((0, 0), (0, pad_out)))
        w1 = jnp.pad(w1, ((0, pad_out), (0, 0)))

    k_dim = x.shape[1]

    # ---- row tiling ----
    # Ragged N is handled by the grid: the tail block's OOB input rows compute
    # garbage but there is no cross-row reduction and their output stores are
    # masked, so valid rows are unaffected.
    tile = max(16, min(int(tile_rows), _round_up(n, 16)))
    # v7x has 2 TensorCores; make sure the "parallel" axis has >=2 steps for
    # mid/large N so both cores get work (no effect on v5e/v6e: 1 TC).
    if n > 512 and pl.cdiv(n, tile) < 2:
        tile = _round_up(pl.cdiv(n, 2), 256)
    grid = (pl.cdiv(n, tile),)

    # Row-tiled input/output; weights & biases are small -> full blocks,
    # resident across the whole grid (index_map pinned to block (0, 0)).
    x_spec = pl.BlockSpec((tile, k_dim), lambda i: (i, 0))
    o_spec = pl.BlockSpec((tile, topo_pad), lambda i: (i, 0))
    w1_spec = pl.BlockSpec(w1.shape, lambda i: (0, 0))
    w2_spec = pl.BlockSpec(w2.shape, lambda i: (0, 0))
    b_spec = pl.BlockSpec((1, topo_pad), lambda i: (0, 0))

    if has_res_proj:
        kernel = _gdv_kernel_resproj
        wr_spec = pl.BlockSpec(wr.shape, lambda i: (0, 0))
        in_specs = [x_spec, w1_spec, b_spec, w2_spec, b_spec, wr_spec]
        operands = (x, w1, b1, w2, b2, wr)
        flops = 2 * n * topo_pad * (k_dim + topo_pad + k_dim)
    else:
        kernel = _gdv_kernel_identity
        in_specs = [x_spec, w1_spec, b_spec, w2_spec, b_spec]
        operands = (x, w1, b1, w2, b2)
        flops = 2 * n * topo_pad * (k_dim + topo_pad)

    weight_bytes = sum(int(a.size) * a.dtype.itemsize for a in operands[1:])
    bytes_accessed = (
        int(x.size) * x.dtype.itemsize
        + weight_bytes
        + n * topo_pad * jnp.dtype(out_dtype).itemsize
    )

    # Right-size the scoped VMEM request (double-buffered x/out tiles +
    # resident weights + headroom), clamped to 16-32 MiB for v7x's 64 MiB TC.
    tile_bytes = (tile * k_dim * x.dtype.itemsize
                  + tile * topo_pad * jnp.dtype(out_dtype).itemsize)
    vmem_limit = int(min(32 << 20,
                         max(16 << 20, 4 * tile_bytes + 2 * weight_bytes + (2 << 20))))

    out = pl.pallas_call(
        kernel,
        out_shape=jax.ShapeDtypeStruct((n, topo_pad), out_dtype),
        grid_spec=pltpu.PrefetchScalarGridSpec(
            num_scalar_prefetch=0,
            grid=grid,
            in_specs=in_specs,
            out_specs=o_spec,
        ),
        compiler_params=pltpu.CompilerParams(
            dimension_semantics=("parallel",),
            vmem_limit_bytes=vmem_limit,
        ),
        cost_estimate=pl.CostEstimate(
            flops=int(flops),
            transcendentals=0,
            bytes_accessed=int(bytes_accessed),
        ),
    )(*operands)

    return out[:, :topo_dim] if pad_out else out


# ---------------------------- Parameter init --------------------------------


def init_gdv_encoder_params(key, gdv_dim, topo_dim, dtype=jnp.float32):
    """Deterministic synthetic init (uniform like torch Linear default)."""
    keys = jax.random.split(key, 6)

    def linear(kw, kb, fan_in, fan_out):
        bound = 1.0 / (fan_in ** 0.5)
        w = jax.random.uniform(kw, (fan_in, fan_out), dtype, -bound, bound)
        b = jax.random.uniform(kb, (1, fan_out), dtype, -bound, bound)
        return w, b

    w1, b1 = linear(keys[0], keys[1], gdv_dim, topo_dim)
    w2, b2 = linear(keys[2], keys[3], topo_dim, topo_dim)
    params = {"w1": w1, "b1": b1, "w2": w2, "b2": b2}
    if gdv_dim != topo_dim:
        wr, br = linear(keys[4], keys[5], gdv_dim, topo_dim)
        params["wr"] = wr
        params["br"] = br
    return params


def gdv_encoder_ref(gdv, params):
    """Pure-JAX reference of the PyTorch forward (f32)."""
    h = jnp.maximum(gdv @ params["w1"] + params["b1"], 0.0)
    out = h @ params["w2"] + params["b2"]
    if "wr" in params:
        out = out + gdv @ params["wr"] + params["br"]
    elif gdv.shape[-1] == out.shape[-1]:
        out = out + gdv
    return out


# --------------------------------- Main --------------------------------------


if __name__ == "__main__":
    key = jax.random.PRNGKey(0)
    k_x, k_p1, k_p2, k_p3, k_p4 = jax.random.split(key, 5)

    # Case 1: gdv_dim != topo_dim -> residual-projection path (16 nodes).
    n, gdv_dim, topo_dim = 16, 64, 128
    gdv = jax.random.normal(k_x, (n, gdv_dim), jnp.float32)
    params = init_gdv_encoder_params(k_p1, gdv_dim, topo_dim)
    ref = gdv_encoder_ref(gdv, params)

    out_f32 = jax.block_until_ready(
        gdv_encoder(gdv, params, compute_dtype=jnp.float32))
    assert out_f32.shape == (n, topo_dim)
    assert jnp.allclose(out_f32, ref, atol=1e-4, rtol=1e-4), "resproj f32 mismatch"

    out_bf16 = jax.block_until_ready(gdv_encoder(gdv, params))
    assert out_bf16.shape == (n, topo_dim)
    assert jnp.allclose(out_bf16, ref, atol=0.15, rtol=0.15), "resproj bf16 mismatch"

    # Case 2: gdv_dim == topo_dim -> identity residual, ragged N (13 rows).
    n2 = 13
    gdv_sq = jax.random.normal(k_x, (n2, topo_dim), jnp.float32)
    params_sq = init_gdv_encoder_params(k_p2, topo_dim, topo_dim)
    out_sq = jax.block_until_ready(
        gdv_encoder(gdv_sq, params_sq, compute_dtype=jnp.float32))
    assert out_sq.shape == (n2, topo_dim)
    assert jnp.allclose(out_sq, gdv_encoder_ref(gdv_sq, params_sq),
                        atol=1e-4, rtol=1e-4), "identity mismatch"

    # Case 3: non-lane-aligned topo_dim (96), residual-projection path.
    n3, gdv3, topo3 = 24, 64, 96
    gdv_p = jax.random.normal(k_x, (n3, gdv3), jnp.float32)
    params_p = init_gdv_encoder_params(k_p3, gdv3, topo3)
    out_p = jax.block_until_ready(
        gdv_encoder(gdv_p, params_p, compute_dtype=jnp.float32))
    assert out_p.shape == (n3, topo3)
    assert jnp.allclose(out_p, gdv_encoder_ref(gdv_p, params_p),
                        atol=1e-4, rtol=1e-4), "padded resproj mismatch"

    # Case 4: non-lane-aligned topo_dim (96), identity-residual path.
    gdv_pi = jax.random.normal(k_x, (n3, topo3), jnp.float32)
    params_pi = init_gdv_encoder_params(k_p4, topo3, topo3)
    out_pi = jax.block_until_ready(
        gdv_encoder(gdv_pi, params_pi, compute_dtype=jnp.float32))
    assert out_pi.shape == (n3, topo3)
    assert jnp.allclose(out_pi, gdv_encoder_ref(gdv_pi, params_pi),
                        atol=1e-4, rtol=1e-4), "padded identity mismatch"

    print("KERNEL_OK")
</pallas_src>

<mosaic_0001>
module attributes {stable_mosaic.version = 11 : i64} {
  func.func @_gdv_kernel_resproj(%arg0: i32, %arg1: memref<16x64xf32, #tpu.memory_space<vmem>>, %arg2: memref<64x128xf32, #tpu.memory_space<vmem>>, %arg3: memref<1x128xf32, #tpu.memory_space<vmem>>, %arg4: memref<128x128xf32, #tpu.memory_space<vmem>>, %arg5: memref<1x128xf32, #tpu.memory_space<vmem>>, %arg6: memref<64x128xf32, #tpu.memory_space<vmem>>, %arg7: memref<16x128xf32, #tpu.memory_space<vmem>>) attributes {dimension_semantics = [#tpu.dimension_semantics<parallel>], iteration_bounds = array<i64: 1>, scalar_prefetch = 0 : i64, scratch_operands = 0 : i64, tpu.core_type = #tpu.core_type<tc>, window_params = [{transform_indices = @transform_0, window_bounds = array<i64: 16, 64>}, {pipeline_mode = #tpu.pipeline_mode<synchronous>, transform_indices = @transform_1, window_bounds = array<i64: 64, 128>}, {pipeline_mode = #tpu.pipeline_mode<synchronous>, transform_indices = @transform_2, window_bounds = array<i64: 1, 128>}, {pipeline_mode = #tpu.pipeline_mode<synchronous>, transform_indices = @transform_3, window_bounds = array<i64: 128, 128>}, {pipeline_mode = #tpu.pipeline_mode<synchronous>, transform_indices = @transform_4, window_bounds = array<i64: 1, 128>}, {pipeline_mode = #tpu.pipeline_mode<synchronous>, transform_indices = @transform_5, window_bounds = array<i64: 64, 128>}, {transform_indices = @transform_6, window_bounds = array<i64: 16, 128>}]} {
    %c0 = arith.constant 0 : index
    %c0_0 = arith.constant 0 : index
    %0 = vector.load %arg1[%c0, %c0_0] : memref<16x64xf32, #tpu.memory_space<vmem>>, vector<16x64xf32>
    %c0_1 = arith.constant 0 : index
    %c0_2 = arith.constant 0 : index
    %1 = vector.load %arg2[%c0_1, %c0_2] : memref<64x128xf32, #tpu.memory_space<vmem>>, vector<64x128xf32>
    %cst = arith.constant dense<0.000000e+00> : vector<16x128xf32>
    %2 = tpu.matmul %0, %1, %cst {dimension_numbers = #tpu.dot_dimension_numbers<[1], [0], [0], [1], [0, 0, 1, 1], [], []>} : vector<16x64xf32>, vector<64x128xf32>, vector<16x128xf32> -> vector<16x128xf32>
    %c0_3 = arith.constant 0 : index
    %c0_4 = arith.constant 0 : index
    %3 = vector.load %arg3[%c0_3, %c0_4] : memref<1x128xf32, #tpu.memory_space<vmem>>, vector<1x128xf32>
    %4 = vector.broadcast %3 : vector<1x128xf32> to vector<16x128xf32>
    %5 = arith.addf %2, %4 : vector<16x128xf32>
    %cst_5 = arith.constant 0.000000e+00 : f32
    %6 = vector.broadcast %cst_5 : f32 to vector<16x128xf32>
    %7 = arith.maximumf %5, %6 : vector<16x128xf32>
    %c0_6 = arith.constant 0 : index
    %c0_7 = arith.constant 0 : index
    %8 = vector.load %arg4[%c0_6, %c0_7] : memref<128x128xf32, #tpu.memory_space<vmem>>, vector<128x128xf32>
    %cst_8 = arith.constant dense<0.000000e+00> : vector<16x128xf32>
    %9 = tpu.matmul %7, %8, %cst_8 {dimension_numbers = #tpu.dot_dimension_numbers<[1], [0], [0], [1], [0, 0, 1, 1], [], []>} : vector<16x128xf32>, vector<128x128xf32>, vector<16x128xf32> -> vector<16x128xf32>
    %c0_9 = arith.constant 0 : index
    %c0_10 = arith.constant 0 : index
    %10 = vector.load %arg6[%c0_9, %c0_10] : memref<64x128xf32, #tpu.memory_space<vmem>>, vector<64x128xf32>
    %cst_11 = arith.constant dense<0.000000e+00> : vector<16x128xf32>
    %11 = tpu.matmul %0, %10, %cst_11 {dimension_numbers = #tpu.dot_dimension_numbers<[1], [0], [0], [1], [0, 0, 1, 1], [], []>} : vector<16x64xf32>, vector<64x128xf32>, vector<16x128xf32> -> vector<16x128xf32>
    %12 = arith.addf %9, %11 : vector<16x128xf32>
    %c0_12 = arith.constant 0 : index
    %c0_13 = arith.constant 0 : index
    %13 = vector.load %arg5[%c0_12, %c0_13] : memref<1x128xf32, #tpu.memory_space<vmem>>, vector<1x128xf32>
    %14 = vector.broadcast %13 : vector<1x128xf32> to vector<16x128xf32>
    %15 = arith.addf %12, %14 : vector<16x128xf32>
    %c0_14 = arith.constant 0 : index
    %c0_15 = arith.constant 0 : index
    %16 = vector.load %arg7[%c0_14, %c0_15] : memref<16x128xf32, #tpu.memory_space<vmem>>, vector<16x128xf32>
    tpu.vector_store %arg7[%c0_14, %c0_15], %15 {strides = array<i32>} : memref<16x128xf32, #tpu.memory_space<vmem>>, vector<16x128xf32>,
    return
  }
  func.func @transform_0(%arg0: i32) -> (i32, i32) {
    %c0_i32 = arith.constant 0 : i32
    %c0_i32_0 = arith.constant 0 : i32
    return %arg0, %c0_i32 : i32, i32
  }
  func.func @transform_1(%arg0: i32) -> (i32, i32) {
    %c0_i32 = arith.constant 0 : i32
    %c0_i32_0 = arith.constant 0 : i32
    %c0_i32_1 = arith.constant 0 : i32
    return %c0_i32, %c0_i32_0 : i32, i32
  }
  func.func @transform_2(%arg0: i32) -> (i32, i32) {
    %c0_i32 = arith.constant 0 : i32
    %c0_i32_0 = arith.constant 0 : i32
    %c0_i32_1 = arith.constant 0 : i32
    return %c0_i32, %c0_i32_0 : i32, i32
  }
  func.func @transform_3(%arg0: i32) -> (i32, i32) {
    %c0_i32 = arith.constant 0 : i32
    %c0_i32_0 = arith.constant 0 : i32
    %c0_i32_1 = arith.constant 0 : i32
    return %c0_i32, %c0_i32_0 : i32, i32
  }
  func.func @transform_4(%arg0: i32) -> (i32, i32) {
    %c0_i32 = arith.constant 0 : i32
    %c0_i32_0 = arith.constant 0 : i32
    %c0_i32_1 = arith.constant 0 : i32
    return %c0_i32, %c0_i32_0 : i32, i32
  }
  func.func @transform_5(%arg0: i32) -> (i32, i32) {
    %c0_i32 = arith.constant 0 : i32
    %c0_i32_0 = arith.constant 0 : i32
    %c0_i32_1 = arith.constant 0 : i32
    return %c0_i32, %c0_i32_0 : i32, i32
  }
  func.func @transform_6(%arg0: i32) -> (i32, i32) {
    %c0_i32 = arith.constant 0 : i32
    %c0_i32_0 = arith.constant 0 : i32
    return %arg0, %c0_i32 : i32, i32
  }
}

</mosaic_0001>

<llo_original>
// kernel: tpu_custom_call.1
$region0: #{tpu_custom_call.1}
  #allocation0 [shape = 'u32[]', space=smem, size = 0x4, offset = 0x4, fixed_abs, tag = 'smem constant byte address 0x4 - core index']
  #allocation1 [shape = 'u32[144,128]{1,0:T(1,128)}', space=vmem, size = 0x12000, scoped, tag = 'internal scratch']
  %s0 = inlined_call_operand.hbm [shape: f32[16,64], index: 0, kind: input, shape index: {}]
  %s1 = inlined_call_operand.hbm [shape: f32[64,128], index: 1, kind: input, shape index: {}]
  %s2 = inlined_call_operand.vmem [shape: f32[1,128], index: 2, kind: input, shape index: {}]
  %s3 = inlined_call_operand.hbm [shape: f32[128,128], index: 3, kind: input, shape index: {}]
  %s4 = inlined_call_operand.vmem [shape: f32[1,128], index: 4, kind: input, shape index: {}]
  %s5 = inlined_call_operand.hbm [shape: f32[64,128], index: 5, kind: input, shape index: {}]
  %s6 = inlined_call_operand.hbm [shape: f32[16,128], index: 6, kind: output, shape index: {}]
  %s7 = sld [smem:[#allocation0]]
  $region50: #{tpu_custom_call.1} parent=0
    _
  %s9 = ssub.s32 1, %s7
  %s10 = scalar_select 0, %s9, %s7
  $region1: #{tpu_custom_call.1} parent=0
    #allocation2 [shape = 'u8[8192]{0}', space=vmem, size = 0x2000, scoped, tag = 'input window, operand 0, single buffered']
    #allocation3 [shape = 's32[1]{0}', space=sflag, size = 0x4, scoped, tag = 'scoped memory for tpu_custom_call.1']
    #allocation4 [shape = 's32[1]{0}', space=sflag, size = 0x4, scoped, tag = 'scoped memory for tpu_custom_call.1']
    #allocation5 [shape = 'u8[32768]{0}', space=vmem, size = 0x8000, scoped, tag = 'input window, operand 1, single buffered']
    #allocation6 [shape = 's32[1]{0}', space=sflag, size = 0x4, scoped, tag = 'scoped memory for tpu_custom_call.1']
    #allocation7 [shape = 'u8[65536]{0}', space=vmem, size = 0x10000, scoped, tag = 'input window, operand 3, single buffered']
    #allocation8 [shape = 'u8[32768]{0}', space=vmem, size = 0x8000, scoped, tag = 'input window, operand 5, single buffered']
    #allocation9 [shape = 's32[1]{0}', space=sflag, size = 0x4, scoped, tag = 'scoped memory for tpu_custom_call.1']
    #allocation10 [shape = 'u8[8192]{0}', space=vmem, size = 0x2000, scoped, tag = 'output window, operand 0, single buffered']
    %11 = vsyncpa [#allocation3], 0
    %12 = vsyncpa [#allocation6], 0
    %13 = vsyncpa [#allocation9], 0
    %14 = vsyncpa [#allocation4], 0
    // Predicated region
    $region2: #{tpu_custom_call.1} parent=1 // pred_check
      _
    $region3: #{tpu_custom_call.1} parent=1 // pred_check_branch
      %16 = sbr.rel (0) target = $region5
    $region4: #{tpu_custom_call.1} parent=1 // pred_region
      %s18 = ssub.s32 256, 256
      %19 = vsyncadd [#allocation3], %s18
      %s20 = sshll.u32 [#allocation2], 4
      %s21 = int_to_ptr.vmem [resolvable:$true] %s20
      %26 = dma.hbm_to_vmem [thread:$0]  %s0, 256, %s21, [#allocation3], 128, 128, 8
    $region5: #{tpu_custom_call.1} parent=1 // pred_fallthru
      _
    // Predicated region
    $region6: #{tpu_custom_call.1} parent=1 // pred_check
      _
    $region7: #{tpu_custom_call.1} parent=1 // pred_check_branch
      %28 = sbr.rel (0) target = $region9
    $region8: #{tpu_custom_call.1} parent=1 // pred_region
      %s30 = ssub.s32 1024, 1024
      %31 = vsyncadd [#allocation6], %s30
      %s32 = sshll.u32 [#allocation5], 4
      %s33 = int_to_ptr.vmem [resolvable:$true] %s32
      %38 = dma.hbm_to_vmem [thread:$0]  %s1, 1024, %s33, [#allocation6], 128, 128, 8
    $region9: #{tpu_custom_call.1} parent=1 // pred_fallthru
      _
    // Predicated region
    $region10: #{tpu_custom_call.1} parent=1 // pred_check
      _
    $region11: #{tpu_custom_call.1} parent=1 // pred_check_branch
      %40 = sbr.rel (0) target = $region13
    $region12: #{tpu_custom_call.1} parent=1 // pred_region
      _
    $region13: #{tpu_custom_call.1} parent=1 // pred_fallthru
      _
    // Predicated region
    $region14: #{tpu_custom_call.1} parent=1 // pred_check
      _
    $region15: #{tpu_custom_call.1} parent=1 // pred_check_branch
      %42 = sbr.rel (0) target = $region17
    $region16: #{tpu_custom_call.1} parent=1 // pred_region
      %s44 = ssub.s32 2048, 2048
      %45 = vsyncadd [#allocation6], %s44
      %s46 = sshll.u32 [#allocation7], 4
      %s47 = int_to_ptr.vmem [resolvable:$true] %s46
      %52 = dma.hbm_to_vmem [thread:$0]  %s3, 2048, %s47, [#allocation6], 128, 128, 8
    $region17: #{tpu_custom_call.1} parent=1 // pred_fallthru
      _
    // Predicated region
    $region18: #{tpu_custom_call.1} parent=1 // pred_check
      _
    $region19: #{tpu_custom_call.1} parent=1 // pred_check_branch
      %54 = sbr.rel (0) target = $region21
    $region20: #{tpu_custom_call.1} parent=1 // pred_region
      _
    $region21: #{tpu_custom_call.1} parent=1 // pred_fallthru
      _
    // Predicated region
    $region22: #{tpu_custom_call.1} parent=1 // pred_check
      _
    $region23: #{tpu_custom_call.1} parent=1 // pred_check_branch
      %56 = sbr.rel (0) target = $region25
    $region24: #{tpu_custom_call.1} parent=1 // pred_region
      %s58 = ssub.s32 1024, 1024
      %59 = vsyncadd [#allocation9], %s58
      %s60 = sshll.u32 [#allocation8], 4
      %s61 = int_to_ptr.vmem [resolvable:$true] %s60
      %66 = dma.hbm_to_vmem [thread:$0]  %s5, 1024, %s61, [#allocation9], 128, 128, 8
    $region25: #{tpu_custom_call.1} parent=1 // pred_fallthru
      _
    // Predicated region
    $region26: #{tpu_custom_call.1} parent=1 // pred_check
      _
    $region27: #{tpu_custom_call.1} parent=1 // pred_check_branch
      %68 = sbr.rel (0) target = $region29
    $region28: #{tpu_custom_call.1} parent=1 // pred_region
      %69 = dma.done [#allocation3], 256
    $region29: #{tpu_custom_call.1} parent=1 // pred_fallthru
      _
    // Predicated region
    $region30: #{tpu_custom_call.1} parent=1 // pred_check
      _
    $region31: #{tpu_custom_call.1} parent=1 // pred_check_branch
      %71 = sbr.rel (0) target = $region33
    $region32: #{tpu_custom_call.1} parent=1 // pred_region
      %72 = dma.done [#allocation6], 1024
    $region33: #{tpu_custom_call.1} parent=1 // pred_fallthru
      _
    // Predicated region
    $region34: #{tpu_custom_call.1} parent=1 // pred_check
      _
    $region35: #{tpu_custom_call.1} parent=1 // pred_check_branch
      %74 = sbr.rel (0) target = $region37
    $region36: #{tpu_custom_call.1} parent=1 // pred_region
      %75 = dma.done [#allocation6], 2048
    $region37: #{tpu_custom_call.1} parent=1 // pred_fallthru
      _
    // Predicated region
    $region38: #{tpu_custom_call.1} parent=1 // pred_check
      _
    $region39: #{tpu_custom_call.1} parent=1 // pred_check_branch
      %77 = sbr.rel (0) target = $region41
    $region40: #{tpu_custom_call.1} parent=1 // pred_region
      %78 = dma.done [#allocation9], 1024
    $region41: #{tpu_custom_call.1} parent=1 // pred_fallthru
      _
    %v79 = vld [vmem:[#allocation2] sm:$0xff]
    %v80 = vld [vmem:[#allocation2 + $0x8] sm:$0xff]
    %v81 = vld [vmem:[#allocation5] sm:$0xff]
    %v82 = vld [vmem:[#allocation5 + $0x8] sm:$0xff]
    %v83 = vld [vmem:[#allocation5 + $0x10] sm:$0xff]
    %v84 = vld [vmem:[#allocation5 + $0x18] sm:$0xff]
    %v85 = vld [vmem:[#allocation5 + $0x20] sm:$0xff]
    %v86 = vld [vmem:[#allocation5 + $0x28] sm:$0xff]
    %v87 = vld [vmem:[#allocation5 + $0x30] sm:$0xff]
    %v88 = vld [vmem:[#allocation5 + $0x38] sm:$0xff]
    %v89 = vld [vmem:[%s2] sm:$0x1]
    %v91 = vlaneseq
    %v92 = vshrl.u32 %v91, 7
    %v93 = vsub.s32 0, %v92
    %v94 = vrot.slane %v89, %v93
    %vm96 = vcmask 523264
    %v98 = vsel %vm96, %v79, 0
    %v101 = vsel %vm96, %v80, 0
    %103 = vmatprep.subr.mxu0 0.0
    %104 = vmatpush1.msra.mxu0 0.0
    %105 = vmatprep.subr.mxu0 0.0
    %106 = vmatpush1.msra.mxu0 0.0
    %107 = vmatprep.subr.mxu0 0.0
    %108 = vmatpush1.msra.mxu0 0.0
    %109 = vmatprep.subr.mxu0 0.0
    %110 = vmatpush1.msra.mxu0 0.0
    %111 = vmatprep.subr.mxu0 0.0
    %112 = vmatpush1.msra.mxu0 0.0
    %113 = vmatprep.subr.mxu0 0.0
    %114 = vmatpush1.msra.mxu0 0.0
    %115 = vmatprep.subr.mxu0 0.0
    %116 = vmatpush1.msra.mxu0 0.0
    %117 = vmatprep.subr.mxu0 0.0
    %118 = vmatpush1.msra.mxu0 0.0
    %119 = vmatprep.subr.mxu0 0.0
    %120 = vmatpush1.msra.mxu0 %v88
    %121 = vmatprep.subr.mxu0 0.0
    %122 = vmatpush1.msra.mxu0 %v87
    %123 = vmatprep.subr.mxu0 0.0
    %124 = vmatpush1.msra.mxu0 %v86
    %125 = vmatprep.subr.mxu0 0.0
    %126 = vmatpush1.msra.mxu0 %v85
    %127 = vmatprep.subr.mxu0 0.0
    %128 = vmatpush1.msra.mxu0 %v84
    %129 = vmatprep.subr.mxu0 0.0
    %130 = vmatpush1.msra.mxu0 %v83
    %131 = vmatprep.subr.mxu0 0.0
    %132 = vmatpush1.msra.mxu0 %v82
    %133 = vmatprep.subr.mxu0 0.0
    %134 = vmatpush1.msra.mxu0 %v81
    %135 = vmatprep.subr.mxu0 0.0
    %136 = vmatpush2.msra.mxu0 0.0
    %137 = vmatprep.subr.mxu0 0.0
    %138 = vmatpush2.msra.mxu0 0.0
    %139 = vmatprep.subr.mxu0 0.0
    %140 = vmatpush2.msra.mxu0 0.0
    %141 = vmatprep.subr.mxu0 0.0
    %142 = vmatpush2.msra.mxu0 0.0
    %143 = vmatprep.subr.mxu0 0.0
    %144 = vmatpush2.msra.mxu0 0.0
    %145 = vmatprep.subr.mxu0 0.0
    %146 = vmatpush2.msra.mxu0 0.0
    %147 = vmatprep.subr.mxu0 0.0
    %148 = vmatpush2.msra.mxu0 0.0
    %149 = vmatprep.subr.mxu0 0.0
    %150 = vmatpush2.msra.mxu0 0.0
    %151 = vmatprep.subr.mxu0 0.0
    %152 = vmatpush2.msra.mxu0 0.0
    %153 = vmatprep.subr.mxu0 0.0
    %154 = vmatpush2.msra.mxu0 0.0
    %155 = vmatprep.subr.mxu0 0.0
    %156 = vmatpush2.msra.mxu0 0.0
    %157 = vmatprep.subr.mxu0 0.0
    %158 = vmatpush2.msra.mxu0 0.0
    %159 = vmatprep.subr.mxu0 0.0
    %160 = vmatpush2.msra.mxu0 0.0
    %161 = vmatprep.subr.mxu0 0.0
    %162 = vmatpush2.msra.mxu0 0.0
    %163 = vmatprep.subr.mxu0 0.0
    %164 = vmatpush2.msra.mxu0 0.0
    %165 = vmatprep.subr.mxu0 0.0
    %166 = vmatpush2.msra.mxu0 0.0
    %167 = vmatprep.mubr.f32.mxu0 0.0
    %168 = vmatmul.mubr.f32.gmra.mxu0 %v98
    %v169 = vpop.f32.mrf.mxu0
    %v170 = vadd.f32 %v94, %v169
    %v171 = vpop.f32.mrf.mxu0
    %172 = vmatprep.mubr.f32.mxu0 0.0
    %173 = vmatmul.mubr.f32.gmra.mxu0 %v101
    %v174 = vpop.f32.mrf.mxu0
    %v175 = vadd.f32 %v94, %v174
    %v176 = vpop.f32.mrf.mxu0
    %177 = vdwg.mxu0
    %v178 = vmax.f32 %v170, 0.0
    %v179 = vmax.f32 %v175, 0.0
    %v180 = vld [vmem:[#allocation7] sm:$0xff]
    %v181 = vld [vmem:[#allocation7 + $0x8] sm:$0xff]
    %v182 = vld [vmem:[#allocation7 + $0x10] sm:$0xff]
    %v183 = vld [vmem:[#allocation7 + $0x18] sm:$0xff]
    %v184 = vld [vmem:[#allocation7 + $0x20] sm:$0xff]
    %v185 = vld [vmem:[#allocation7 + $0x28] sm:$0xff]
    %v186 = vld [vmem:[#allocation7 + $0x30] sm:$0xff]
    %v187 = vld [vmem:[#allocation7 + $0x38] sm:$0xff]
    %v188 = vld [vmem:[#allocation7 + $0x40] sm:$0xff]
    %v189 = vld [vmem:[#allocation7 + $0x48] sm:$0xff]
    %v190 = vld [vmem:[#allocation7 + $0x50] sm:$0xff]
    %v191 = vld [vmem:[#allocation7 + $0x58] sm:$0xff]
    %v192 = vld [vmem:[#allocation7 + $0x60] sm:$0xff]
    %v193 = vld [vmem:[#allocation7 + $0x68] sm:$0xff]
    %v194 = vld [vmem:[#allocation7 + $0x70] sm:$0xff]
    %v195 = vld [vmem:[#allocation7 + $0x78] sm:$0xff]
    %v196 = vld [vmem:[#allocation8] sm:$0xff]
    %v197 = vld [vmem:[#allocation8 + $0x8] sm:$0xff]
    %v198 = vld [vmem:[#allocation8 + $0x10] sm:$0xff]
    %v199 = vld [vmem:[#allocation8 + $0x18] sm:$0xff]
    %v200 = vld [vmem:[#allocation8 + $0x20] sm:$0xff]
    %v201 = vld [vmem:[#allocation8 + $0x28] sm:$0xff]
    %v202 = vld [vmem:[#allocation8 + $0x30] sm:$0xff]
    %v203 = vld [vmem:[#allocation8 + $0x38] sm:$0xff]
    %204 = vmatprep.subr.mxu0 0.0
    %205 = vmatpush1.msra.mxu0 0.0
    %206 = vmatprep.subr.mxu0 0.0
    %207 = vmatpush1.msra.mxu0 0.0
    %208 = vmatprep.subr.mxu0 0.0
    %209 = vmatpush1.msra.mxu0 0.0
    %210 = vmatprep.subr.mxu0 0.0
    %211 = vmatpush1.msra.mxu0 0.0
    %212 = vmatprep.subr.mxu0 0.0
    %213 = vmatpush1.msra.mxu0 0.0
    %214 = vmatprep.subr.mxu0 0.0
    %215 = vmatpush1.msra.mxu0 0.0
    %216 = vmatprep.subr.mxu0 0.0
    %217 = vmatpush1.msra.mxu0 0.0
    %218 = vmatprep.subr.mxu0 0.0
    %219 = vmatpush1.msra.mxu0 0.0
    %220 = vmatprep.subr.mxu0 0.0
    %221 = vmatpush1.msra.mxu0 %v203
    %222 = vmatprep.subr.mxu0 0.0
    %223 = vmatpush1.msra.mxu0 %v202
    %224 = vmatprep.subr.mxu0 0.0
    %225 = vmatpush1.msra.mxu0 %v201
    %226 = vmatprep.subr.mxu0 0.0
    %227 = vmatpush1.msra.mxu0 %v200
    %228 = vmatprep.subr.mxu0 0.0
    %229 = vmatpush1.msra.mxu0 %v199
    %230 = vmatprep.subr.mxu0 0.0
    %231 = vmatpush1.msra.mxu0 %v198
    %232 = vmatprep.subr.mxu0 0.0
    %233 = vmatpush1.msra.mxu0 %v197
    %234 = vmatprep.subr.mxu0 0.0
    %235 = vmatpush1.msra.mxu0 %v196
    %236 = vmatprep.subr.mxu0 0.0
    %237 = vmatpush2.msra.mxu0 0.0
    %238 = vmatprep.subr.mxu0 0.0
    %239 = vmatpush2.msra.mxu0 0.0
    %240 = vmatprep.subr.mxu0 0.0
    %241 = vmatpush2.msra.mxu0 0.0
    %242 = vmatprep.subr.mxu0 0.0
    %243 = vmatpush2.msra.mxu0 0.0
    %244 = vmatprep.subr.mxu0 0.0
    %245 = vmatpush2.msra.mxu0 0.0
    %246 = vmatprep.subr.mxu0 0.0
    %247 = vmatpush2.msra.mxu0 0.0
    %248 = vmatprep.subr.mxu0 0.0
    %249 = vmatpush2.msra.mxu0 0.0
    %250 = vmatprep.subr.mxu0 0.0
    %251 = vmatpush2.msra.mxu0 0.0
    %252 = vmatprep.subr.mxu0 0.0
    %253 = vmatpush2.msra.mxu0 0.0
    %254 = vmatprep.subr.mxu0 0.0
    %255 = vmatpush2.msra.mxu0 0.0
    %256 = vmatprep.subr.mxu0 0.0
    %257 = vmatpush2.msra.mxu0 0.0
    %258 = vmatprep.subr.mxu0 0.0
    %259 = vmatpush2.msra.mxu0 0.0
    %260 = vmatprep.subr.mxu0 0.0
    %261 = vmatpush2.msra.mxu0 0.0
    %262 = vmatprep.subr.mxu0 0.0
    %263 = vmatpush2.msra.mxu0 0.0
    %264 = vmatprep.subr.mxu0 0.0
    %265 = vmatpush2.msra.mxu0 0.0
    %266 = vmatprep.subr.mxu0 0.0
    %267 = vmatpush2.msra.mxu0 0.0
    %268 = vmatprep.mubr.f32.mxu0 0.0
    %269 = vmatmul.mubr.f32.gmra.mxu0 %v98
    %v270 = vpop.f32.mrf.mxu0
    %v271 = vadd.f32 0.0, %v270
    %v272 = vpop.f32.mrf.mxu0
    %273 = vmatprep.mubr.f32.mxu0 0.0
    %274 = vmatmul.mubr.f32.gmra.mxu0 %v101
    %v275 = vpop.f32.mrf.mxu0
    %v276 = vadd.f32 0.0, %v275
    %v277 = vpop.f32.mrf.mxu0
    %278 = vdwg.mxu0
    %279 = vmatprep.subr.mxu0 0.0
    %280 = vmatpush1.msra.mxu0 %v195
    %281 = vmatprep.subr.mxu0 0.0
    %282 = vmatpush1.msra.mxu0 %v194
    %283 = vmatprep.subr.mxu0 0.0
    %284 = vmatpush1.msra.mxu0 %v193
    %285 = vmatprep.subr.mxu0 0.0
    %286 = vmatpush1.msra.mxu0 %v192
    %287 = vmatprep.subr.mxu0 0.0
    %288 = vmatpush1.msra.mxu0 %v191
    %289 = vmatprep.subr.mxu0 0.0
    %290 = vmatpush1.msra.mxu0 %v190
    %291 = vmatprep.subr.mxu0 0.0
    %292 = vmatpush1.msra.mxu0 %v189
    %293 = vmatprep.subr.mxu0 0.0
    %294 = vmatpush1.msra.mxu0 %v188
    %295 = vmatprep.subr.mxu0 0.0
    %296 = vmatpush1.msra.mxu0 %v187
    %297 = vmatprep.subr.mxu0 0.0
    %298 = vmatpush1.msra.mxu0 %v186
    %299 = vmatprep.subr.mxu0 0.0
    %300 = vmatpush1.msra.mxu0 %v185
    %301 = vmatprep.subr.mxu0 0.0
    %302 = vmatpush1.msra.mxu0 %v184
    %303 = vmatprep.subr.mxu0 0.0
    %304 = vmatpush1.msra.mxu0 %v183
    %305 = vmatprep.subr.mxu0 0.0
    %306 = vmatpush1.msra.mxu0 %v182
    %307 = vmatprep.subr.mxu0 0.0
    %308 = vmatpush1.msra.mxu0 %v181
    %309 = vmatprep.subr.mxu0 0.0
    %310 = vmatpush1.msra.mxu0 %v180
    %311 = vmatprep.subr.mxu0 0.0
    %312 = vmatpush2.msra.mxu0 0.0
    %313 = vmatprep.subr.mxu0 0.0
    %314 = vmatpush2.msra.mxu0 0.0
    %315 = vmatprep.subr.mxu0 0.0
    %316 = vmatpush2.msra.mxu0 0.0
    %317 = vmatprep.subr.mxu0 0.0
    %318 = vmatpush2.msra.mxu0 0.0
    %319 = vmatprep.subr.mxu0 0.0
    %320 = vmatpush2.msra.mxu0 0.0
    %321 = vmatprep.subr.mxu0 0.0
    %322 = vmatpush2.msra.mxu0 0.0
    %323 = vmatprep.subr.mxu0 0.0
    %324 = vmatpush2.msra.mxu0 0.0
    %325 = vmatprep.subr.mxu0 0.0
    %326 = vmatpush2.msra.mxu0 0.0
    %327 = vmatprep.subr.mxu0 0.0
    %328 = vmatpush2.msra.mxu0 0.0
    %329 = vmatprep.subr.mxu0 0.0
    %330 = vmatpush2.msra.mxu0 0.0
    %331 = vmatprep.subr.mxu0 0.0
    %332 = vmatpush2.msra.mxu0 0.0
    %333 = vmatprep.subr.mxu0 0.0
    %334 = vmatpush2.msra.mxu0 0.0
    %335 = vmatprep.subr.mxu0 0.0
    %336 = vmatpush2.msra.mxu0 0.0
    %337 = vmatprep.subr.mxu0 0.0
    %338 = vmatpush2.msra.mxu0 0.0
    %339 = vmatprep.subr.mxu0 0.0
    %340 = vmatpush2.msra.mxu0 0.0
    %341 = vmatprep.subr.mxu0 0.0
    %342 = vmatpush2.msra.mxu0 0.0
    %343 = vmatprep.mubr.f32.mxu0 0.0
    %344 = vmatmul.mubr.f32.gmra.mxu0 %v178
    %v345 = vpop.f32.mrf.mxu0
    %v346 = vadd.f32 %v271, %v345
    %v347 = vpop.f32.mrf.mxu0
    %348 = vmatprep.mubr.f32.mxu0 0.0
    %349 = vmatmul.mubr.f32.gmra.mxu0 %v179
    %v350 = vpop.f32.mrf.mxu0
    %v351 = vadd.f32 %v276, %v350
    %v352 = vpop.f32.mrf.mxu0
    %353 = vdwg.mxu0
    %v354 = vld [vmem:[%s4] sm:$0x1]
    %v356 = vlaneseq
    %v357 = vshrl.u32 %v356, 7
    %v358 = vsub.s32 0, %v357
    %v359 = vrot.slane %v354, %v358
    %v361 = vadd.f32 %v346, %v359
    %v362 = vadd.f32 %v351, %v359
    %363 = vst [vmem:[#allocation10] sm:$0xff] %v361
    %364 = vst [vmem:[#allocation10 + $0x8] sm:$0xff] %v362
    // Predicated region
    $region42: #{tpu_custom_call.1} parent=1 // pred_check
      _
    $region43: #{tpu_custom_call.1} parent=1 // pred_check_branch
      %366 = sbr.rel (0) target = $region45
    $region44: #{tpu_custom_call.1} parent=1 // pred_region
      %s368 = ssub.s32 256, 256
      %369 = vsyncadd [#allocation4], %s368
      %s370 = sshll.u32 [#allocation10], 4
      %s371 = int_to_ptr.vmem [resolvable:$true] %s370
      %376 = dma.vmem_to_hbm [thread:$0]  %s371, 256, %s6, [#allocation4], 128, 128, 8
    $region45: #{tpu_custom_call.1} parent=1 // pred_fallthru
      _
    // Predicated region
    $region46: #{tpu_custom_call.1} parent=1 // pred_check
      _
    $region47: #{tpu_custom_call.1} parent=1 // pred_check_branch
      %378 = sbr.rel (0) target = $region49
    $region48: #{tpu_custom_call.1} parent=1 // pred_region
      %379 = dma.done [#allocation4], 256
    $region49: #{tpu_custom_call.1} parent=1 // pred_fallthru
      _
    %380 = vsyncpa [#allocation3], 1
    %381 = vsyncpa [#allocation6], 1
    %382 = vsyncpa [#allocation9], 1
    %383 = vsyncpa [#allocation4], 1

</llo_original>
